<compile_context>
chip_gen: v5e
topology: v5e:2x2
jax: 0.10.0
libtpu: 0.0.40
codegen_flags: <defaults>
</compile_context>

<pallas_src>
import functools
import math

import jax
import jax.numpy as jnp
from jax.experimental import pallas as pl
from jax.experimental.pallas import tpu as pltpu

# ----------------------------- module configuration ---------------------------------
HEADS = 4
SEQ_LEN = 8                      # keep a multiple of 8 (sublane-aligned reshapes)
FEATURES = 32
FFN_FEATURES = 64
AE_HIDDEN = 16
CHUNK = True                     # hidden_features = ffn_features // 2
HIDDEN = FFN_FEATURES // 2 if CHUNK else FFN_FEATURES
HEAD_DIM = HIDDEN // HEADS
HS = HEADS * SEQ_LEN             # rows of the AutoNNMF weight matrix W
LN_EPS = 1e-5                    # torch.nn.LayerNorm default eps


def _erf(x):
    # Abramowitz & Stegun 7.1.26 (|err| <= 1.5e-7 ~ f32 precision): reproduces
    # torch.nn.GELU()'s exact erf-based GELU.  1/(1+p|x|) goes to the EUP.
    p = 0.3275911
    a1, a2, a3, a4, a5 = (0.254829592, -0.284496736, 1.421413741,
                          -1.453152027, 1.061405429)
    s = jnp.where(x >= 0.0, 1.0, -1.0)
    ax = jnp.abs(x)
    t = pl.reciprocal(1.0 + p * ax, approx=True)
    poly = ((((a5 * t + a4) * t + a3) * t + a2) * t + a1) * t
    return s * (1.0 - poly * jnp.exp(-ax * ax))


def _gelu_exact(x):
    return 0.5 * x * (1.0 + _erf(x * (1.0 / math.sqrt(2.0))))


# ----------------------------------- kernel -----------------------------------------
def _ae_attention_kernel(x_ref, wu_ref, bu_ref, g_ref, beta_ref, m_ref, e2_ref,
                         dmask_ref, e_ref, wv_ref, bv_ref, o_ref,
                         *, heads, seq_len, hidden, head_dim, batch_tile, mm_dtype):
    H, S, D, Bt = heads, seq_len, head_dim, batch_tile
    R = Bt * S
    f32 = jnp.float32

    def mm(a, b):                       # 2-D MXU matmul, f32 accumulate
        return jnp.dot(a.astype(mm_dtype), b.astype(mm_dtype),
                       preferred_element_type=f32)

    def bmm_nt(a, b):                   # batched 'bqd,bkd->bqk'
        return jnp.einsum('bqd,bkd->bqk', a.astype(mm_dtype), b.astype(mm_dtype),
                          preferred_element_type=f32)

    def bmm_nn(a, b):                   # batched 'bqk,bkd->bqd'
        return jnp.einsum('bqk,bkd->bqd', a.astype(mm_dtype), b.astype(mm_dtype),
                          preferred_element_type=f32)

    xb = x_ref[...]                                                   # [R, F]

    # ---- U projection + exact GELU over the whole batch tile ----
    u = mm(xb, wu_ref[...]) + bu_ref[...]                             # [R, FF]
    u = _gelu_exact(u)

    # chunk: x, z = u.chunk(2, dim=-1); z = LayerNorm(z)   (biased var, as torch)
    xc = u[:, :hidden]                                                # [R, hidden]
    zc = u[:, hidden:]                                                # [R, hidden]
    mu = jnp.mean(zc, axis=-1, keepdims=True)
    cen = zc - mu
    var = jnp.mean(cen * cen, axis=-1, keepdims=True)
    z = cen * jax.lax.rsqrt(var + LN_EPS) * g_ref[...] + beta_ref[...]

    # ---- head-major relayout (one lane slice per head for the whole tile) ----
    #   t3[b, h*S + s, d] = t[b*S + s, h*D + d]
    def to_heads(t):
        return jnp.concatenate(
            [t[:, h * D:(h + 1) * D].reshape(Bt, S, D) for h in range(H)], axis=1)

    z3 = to_heads(z)                                                  # [Bt, HS, D]
    x3 = to_heads(xc).reshape(Bt * H, S, D)                           # [BtH, S, D]

    # ---- batched Gram + masked-prediction collapse (MXU-shaped matmuls) ----
    #   G_b = z_hf_b @ z_hf_b.T ;  P_b = M * G_b
    #   dist[b, h, i, j] = sum_{h'} P_b[h'S+i, hS+j]   (M, G symmetric)
    #                    = ((E2 @ P_b) * Dmask) @ E    with 0/1 selectors
    G = bmm_nt(z3, z3)                                                # [Bt, HS, HS]
    P = G * m_ref[...]                                                # [Bt, HS, HS]
    HSd = H * S
    e2b = jnp.broadcast_to(e2_ref[...][None], (Bt, HSd, HSd))
    t1 = bmm_nn(e2b, P)                                               # [Bt, HS, HS]
    t2 = t1 * dmask_ref[...]
    eb = jnp.broadcast_to(e_ref[...][None], (Bt, HSd, S))
    dist = bmm_nn(t2, eb)                                             # [Bt, HS(h,i), S_j]

    # ---- fused softmax over j (last axis), one pass for the whole tile ----
    d3 = dist.reshape(Bt * H, S, S)                                   # [BtH, S_i, S_j]
    mx = jnp.max(d3, axis=-1, keepdims=True)
    e = jnp.exp(d3 - mx)
    den = jnp.sum(e, axis=-1, keepdims=True)
    a = e * pl.reciprocal(den, approx=True)                           # [BtH, S_i, S_j]

    # ---- attention: out[bh, i, d] = sum_j a[bh, i, j] * x3[bh, j, d] ----
    out3 = bmm_nn(a, x3)                                              # [BtH, S_i, D]

    # merge heads back into the lane dim: [BtH, S, D] -> [R, hidden]
    out4 = out3.reshape(Bt, H, S, D)
    attn = jnp.concatenate([out4[:, h].reshape(R, D) for h in range(H)], axis=-1)

    # ---- V projection ----
    y = mm(attn, wv_ref[...]) + bv_ref[...]                           # [R, F]
    o_ref[...] = y.astype(o_ref.dtype)


# ----------------------------------- wrapper -----------------------------------------
def _pick_batch_tile(B, S):
    # Target ~256 rows per grid step (fills MXU M dim on v6e/v7x; >=128 on v5e),
    # but keep >=2 grid steps when B > 1 so the 'parallel' axis can be split
    # across v7x's two TensorCores.
    bt = max(1, min(B, 256 // S))
    if B > 1 and pl.cdiv(B, bt) < 2:
        bt = pl.cdiv(B, 2)
    return bt


def ae_attention_heads(x, params, *, batch_tile=None, matmul_dtype=jnp.float32):
    B, S, F = x.shape
    assert S == SEQ_LEN and F == FEATURES
    wu, bu, gamma, beta = params["wu"], params["bu"], params["gamma"], params["beta"]
    wae, wv, bv = params["wae"], params["wv"], params["bv"]
    FF = wu.shape[1]

    # Batch-invariant, weight-only operators hoisted out of the kernel.
    M = jnp.dot(wae, wae.T)                                           # [HS, HS]
    eye_s = jnp.eye(S, dtype=x.dtype)
    E2 = jnp.tile(eye_s, (HEADS, HEADS))                              # delta(i, i')
    Dmask = jnp.kron(jnp.eye(HEADS, dtype=x.dtype), jnp.ones((S, S), x.dtype))
    E = jnp.tile(eye_s, (HEADS, 1))                                   # delta(j, j_out)

    bt = _pick_batch_tile(B, S) if batch_tile is None else batch_tile
    grid = pl.cdiv(B, bt)
    Bp = grid * bt
    if Bp != B:          # remainder path: zero-pad the batch, slice the result
        x = jnp.concatenate([x, jnp.zeros((Bp - B, S, F), x.dtype)], axis=0)
    x2d = x.reshape(Bp * S, F)

    kernel = functools.partial(
        _ae_attention_kernel, heads=HEADS, seq_len=S, hidden=HIDDEN,
        head_dim=HEAD_DIM, batch_tile=bt, mm_dtype=matmul_dtype)

    out2d = pl.pallas_call(
        kernel,
        out_shape=jax.ShapeDtypeStruct((Bp * S, F), x.dtype),
        grid=(grid,),
        in_specs=[
            pl.BlockSpec((bt * S, F), lambda b: (b, 0)),       # x rows of this tile
            pl.BlockSpec((F, FF), lambda b: (0, 0)),           # U weight
            pl.BlockSpec((1, FF), lambda b: (0, 0)),           # U bias
            pl.BlockSpec((1, HIDDEN), lambda b: (0, 0)),       # LN gamma
            pl.BlockSpec((1, HIDDEN), lambda b: (0, 0)),       # LN beta
            pl.BlockSpec((HS, HS), lambda b: (0, 0)),          # M = W @ W.T
            pl.BlockSpec((HS, HS), lambda b: (0, 0)),          # E2 selector
            pl.BlockSpec((HS, HS), lambda b: (0, 0)),          # Dmask selector
            pl.BlockSpec((HS, S), lambda b: (0, 0)),           # E selector
            pl.BlockSpec((HIDDEN, F), lambda b: (0, 0)),       # V weight
            pl.BlockSpec((1, F), lambda b: (0, 0)),            # V bias
        ],
        out_specs=pl.BlockSpec((bt * S, F), lambda b: (b, 0)),
        compiler_params=pltpu.CompilerParams(
            dimension_semantics=("parallel",),
            vmem_limit_bytes=32 * 1024 * 1024),
    )(x2d, wu, bu, gamma, beta, M, E2, Dmask, E, wv, bv)

    out = out2d.reshape(Bp, S, F)
    return out[:B] if Bp != B else out


# ------------------------- plain-JAX reference (literal translation) -----------------
def _reference_forward(x, params):
    wu, bu, gamma, beta = params["wu"], params["bu"], params["gamma"], params["beta"]
    wae, wv, bv = params["wae"], params["wv"], params["bv"]
    B, S, F = x.shape
    u = x @ wu + bu
    u = 0.5 * u * (1.0 + jax.scipy.special.erf(u / jnp.sqrt(2.0)))     # exact GELU
    xc, z = u[..., :HIDDEN], u[..., HIDDEN:]
    mu = z.mean(-1, keepdims=True)
    var = ((z - mu) ** 2).mean(-1, keepdims=True)
    z = (z - mu) / jnp.sqrt(var + LN_EPS) * gamma + beta

    def heads_split(t):
        t = t.reshape(t.shape[:-1] + (HEADS, t.shape[-1] // HEADS))
        return jnp.swapaxes(t, -2, -3)

    x_heads = heads_split(xc)                                          # [B,H,S,D]
    z_heads = heads_split(z)                                           # [B,H,S,D]
    eye = jnp.eye(S)[None, :, :, None]
    z_mask = eye * z[:, None, :, :]                                    # [B,S,S,hidden]
    z_mask_heads = heads_split(z_mask)                                 # [B,S,H,S,D]
    z_in = z_mask_heads.reshape(B, S, HEADS * S, HEAD_DIM)
    M = wae @ wae.T
    ae_preds = jnp.einsum("kl,bild->bikd", M, z_in).reshape(z_mask_heads.shape)
    dist = jnp.sum(ae_preds * z_heads[:, None], axis=-1)               # [B,S,H,S]
    dist = jnp.swapaxes(dist, 1, 2)                                    # [B,H,S,S]
    attn_map = jax.nn.softmax(dist, axis=-1)
    attn = jnp.einsum("bhij,bhjf->bihf", attn_map, x_heads)            # [B,S,H,D]
    attn = attn.reshape(B, S, HIDDEN)
    return attn @ wv + bv


# ------------------------------------- main -------------------------------------------
if __name__ == "__main__":
    key = jax.random.PRNGKey(0)
    kx, k1, k2, k3, k4, k5, kx2 = jax.random.split(key, 7)

    params = dict(
        wu=jax.random.normal(k1, (FEATURES, FFN_FEATURES), jnp.float32) / math.sqrt(FEATURES),
        bu=0.01 * jax.random.normal(k2, (1, FFN_FEATURES), jnp.float32),
        gamma=jnp.ones((1, HIDDEN), jnp.float32),
        beta=jnp.zeros((1, HIDDEN), jnp.float32),
        # AutoNNMF weights are non-negative; deterministic synthetic init.
        wae=0.1 * jnp.abs(jax.random.normal(k3, (HS, AE_HIDDEN), jnp.float32)),
        wv=jax.random.normal(k4, (HIDDEN, FEATURES), jnp.float32) / math.sqrt(HIDDEN),
        bv=0.01 * jax.random.normal(k5, (1, FEATURES), jnp.float32),
    )

    # (1) f32 matmuls: tight check against the literal-translation reference.
    B = 2
    x = jax.random.normal(kx, (B, SEQ_LEN, FEATURES), jnp.float32)
    out = jax.block_until_ready(ae_attention_heads(x, params))
    assert out.shape == (B, SEQ_LEN, FEATURES)
    assert bool(jnp.all(jnp.isfinite(out)))
    ref = _reference_forward(x, params)
    err = float(jnp.max(jnp.abs(out - ref)))
    assert err < 2e-2, f"f32 kernel/reference mismatch: max abs err = {err}"

    # (2) bf16 MXU operands (v6e/v7x review item) + non-divisible batch (padded
    #     remainder path).  bf16 operand rounding relaxes bit-accuracy (f32
    #     accumulation and elementwise math retained), hence the looser bound.
    B2 = 5
    x2 = jax.random.normal(kx2, (B2, SEQ_LEN, FEATURES), jnp.float32)
    out2 = jax.block_until_ready(
        ae_attention_heads(x2, params, matmul_dtype=jnp.bfloat16))
    assert out2.shape == (B2, SEQ_LEN, FEATURES)
    assert bool(jnp.all(jnp.isfinite(out2)))
    ref2 = _reference_forward(x2, params)
    err2 = float(jnp.max(jnp.abs(out2 - ref2)))
    assert err2 < 1e-1, f"bf16 kernel/reference mismatch: max abs err = {err2}"

    print("KERNEL_OK")
</pallas_src>

<mosaic_0001>
module attributes {stable_mosaic.version = 11 : i64} {
  func.func @_ae_attention_kernel(%arg0: i32, %arg1: memref<8x32xf32, #tpu.memory_space<vmem>>, %arg2: memref<32x64xf32, #tpu.memory_space<vmem>>, %arg3: memref<1x64xf32, #tpu.memory_space<vmem>>, %arg4: memref<1x32xf32, #tpu.memory_space<vmem>>, %arg5: memref<1x32xf32, #tpu.memory_space<vmem>>, %arg6: memref<32x32xf32, #tpu.memory_space<vmem>>, %arg7: memref<32x32xf32, #tpu.memory_space<vmem>>, %arg8: memref<32x32xf32, #tpu.memory_space<vmem>>, %arg9: memref<32x8xf32, #tpu.memory_space<vmem>>, %arg10: memref<32x32xf32, #tpu.memory_space<vmem>>, %arg11: memref<1x32xf32, #tpu.memory_space<vmem>>, %arg12: memref<8x32xf32, #tpu.memory_space<vmem>>) attributes {dimension_semantics = [#tpu.dimension_semantics<parallel>], iteration_bounds = array<i64: 2>, scalar_prefetch = 0 : i64, scratch_operands = 0 : i64, tpu.core_type = #tpu.core_type<tc>, window_params = [{transform_indices = @transform_0, window_bounds = array<i64: 8, 32>}, {pipeline_mode = #tpu.pipeline_mode<synchronous>, transform_indices = @transform_1, window_bounds = array<i64: 32, 64>}, {pipeline_mode = #tpu.pipeline_mode<synchronous>, transform_indices = @transform_2, window_bounds = array<i64: 1, 64>}, {pipeline_mode = #tpu.pipeline_mode<synchronous>, transform_indices = @transform_3, window_bounds = array<i64: 1, 32>}, {pipeline_mode = #tpu.pipeline_mode<synchronous>, transform_indices = @transform_4, window_bounds = array<i64: 1, 32>}, {pipeline_mode = #tpu.pipeline_mode<synchronous>, transform_indices = @transform_5, window_bounds = array<i64: 32, 32>}, {pipeline_mode = #tpu.pipeline_mode<synchronous>, transform_indices = @transform_6, window_bounds = array<i64: 32, 32>}, {pipeline_mode = #tpu.pipeline_mode<synchronous>, transform_indices = @transform_7, window_bounds = array<i64: 32, 32>}, {pipeline_mode = #tpu.pipeline_mode<synchronous>, transform_indices = @transform_8, window_bounds = array<i64: 32, 8>}, {pipeline_mode = #tpu.pipeline_mode<synchronous>, transform_indices = @transform_9, window_bounds = array<i64: 32, 32>}, {pipeline_mode = #tpu.pipeline_mode<synchronous>, transform_indices = @transform_10, window_bounds = array<i64: 1, 32>}, {transform_indices = @transform_11, window_bounds = array<i64: 8, 32>}]} {
    %c0 = arith.constant 0 : index
    %c0_0 = arith.constant 0 : index
    %0 = vector.load %arg1[%c0, %c0_0] : memref<8x32xf32, #tpu.memory_space<vmem>>, vector<8x32xf32>
    %c0_1 = arith.constant 0 : index
    %c0_2 = arith.constant 0 : index
    %1 = vector.load %arg2[%c0_1, %c0_2] : memref<32x64xf32, #tpu.memory_space<vmem>>, vector<32x64xf32>
    %cst = arith.constant dense<0.000000e+00> : vector<8x64xf32>
    %2 = tpu.matmul %0, %1, %cst {dimension_numbers = #tpu.dot_dimension_numbers<[1], [0], [0], [1], [0, 0, 1, 1], [], []>} : vector<8x32xf32>, vector<32x64xf32>, vector<8x64xf32> -> vector<8x64xf32>
    %c0_3 = arith.constant 0 : index
    %c0_4 = arith.constant 0 : index
    %3 = vector.load %arg3[%c0_3, %c0_4] : memref<1x64xf32, #tpu.memory_space<vmem>>, vector<1x64xf32>
    %4 = vector.broadcast %3 : vector<1x64xf32> to vector<8x64xf32>
    %5 = arith.addf %2, %4 : vector<8x64xf32>
    %cst_5 = arith.constant 5.000000e-01 : f32
    %6 = vector.broadcast %cst_5 : f32 to vector<8x64xf32>
    %7 = arith.mulf %6, %5 : vector<8x64xf32>
    %cst_6 = arith.constant 0.707106769 : f32
    %8 = vector.broadcast %cst_6 : f32 to vector<8x64xf32>
    %9 = arith.mulf %5, %8 : vector<8x64xf32>
    %cst_7 = arith.constant 0.000000e+00 : f32
    %10 = vector.broadcast %cst_7 : f32 to vector<8x64xf32>
    %11 = arith.cmpf oge, %9, %10 : vector<8x64xf32>
    %cst_8 = arith.constant 1.000000e+00 : f32
    %cst_9 = arith.constant -1.000000e+00 : f32
    %12 = vector.broadcast %cst_8 : f32 to vector<8x64xf32>
    %13 = vector.broadcast %cst_9 : f32 to vector<8x64xf32>
    %14 = arith.select %11, %12, %13 : vector<8x64xi1>, vector<8x64xf32>
    %15 = math.absf %9 : vector<8x64xf32>
    %cst_10 = arith.constant 0.327591091 : f32
    %16 = vector.broadcast %cst_10 : f32 to vector<8x64xf32>
    %17 = arith.mulf %16, %15 : vector<8x64xf32>
    %cst_11 = arith.constant 1.000000e+00 : f32
    %18 = vector.broadcast %cst_11 : f32 to vector<8x64xf32>
    %19 = arith.addf %18, %17 : vector<8x64xf32>
    %20 = tpu.reciprocal %19 {approx = true} : vector<8x64xf32> -> vector<8x64xf32>
    %cst_12 = arith.constant 1.06140542 : f32
    %21 = vector.broadcast %cst_12 : f32 to vector<8x64xf32>
    %22 = arith.mulf %21, %20 : vector<8x64xf32>
    %cst_13 = arith.constant -1.45315206 : f32
    %23 = vector.broadcast %cst_13 : f32 to vector<8x64xf32>
    %24 = arith.addf %22, %23 : vector<8x64xf32>
    %25 = arith.mulf %24, %20 : vector<8x64xf32>
    %cst_14 = arith.constant 1.42141378 : f32
    %26 = vector.broadcast %cst_14 : f32 to vector<8x64xf32>
    %27 = arith.addf %25, %26 : vector<8x64xf32>
    %28 = arith.mulf %27, %20 : vector<8x64xf32>
    %cst_15 = arith.constant -0.284496725 : f32
    %29 = vector.broadcast %cst_15 : f32 to vector<8x64xf32>
    %30 = arith.addf %28, %29 : vector<8x64xf32>
    %31 = arith.mulf %30, %20 : vector<8x64xf32>
    %cst_16 = arith.constant 0.254829586 : f32
    %32 = vector.broadcast %cst_16 : f32 to vector<8x64xf32>
    %33 = arith.addf %31, %32 : vector<8x64xf32>
    %34 = arith.mulf %33, %20 : vector<8x64xf32>
    %cst_17 = arith.constant 0.000000e+00 : f32
    %35 = vector.broadcast %cst_17 : f32 to vector<8x64xf32>
    %36 = arith.subf %35, %15 : vector<8x64xf32>
    %37 = arith.mulf %36, %15 : vector<8x64xf32>
    %38 = math.exp %37 : vector<8x64xf32>
    %39 = arith.mulf %34, %38 : vector<8x64xf32>
    %cst_18 = arith.constant 1.000000e+00 : f32
    %40 = vector.broadcast %cst_18 : f32 to vector<8x64xf32>
    %41 = arith.subf %40, %39 : vector<8x64xf32>
    %42 = arith.mulf %14, %41 : vector<8x64xf32>
    %cst_19 = arith.constant 1.000000e+00 : f32
    %43 = vector.broadcast %cst_19 : f32 to vector<8x64xf32>
    %44 = arith.addf %43, %42 : vector<8x64xf32>
    %45 = arith.mulf %7, %44 : vector<8x64xf32>
    %46 = vector.extract_strided_slice %45 {offsets = [0, 0], sizes = [8, 32], strides = [1, 1]} : vector<8x64xf32> to vector<8x32xf32>
    %47 = vector.extract_strided_slice %45 {offsets = [0, 32], sizes = [8, 32], strides = [1, 1]} : vector<8x64xf32> to vector<8x32xf32>
    %cst_20 = arith.constant dense<0.000000e+00> : vector<8xf32>
    %48 = vector.multi_reduction <add>, %47, %cst_20 [1] : vector<8x32xf32> to vector<8xf32>
    %49 = vector.shape_cast %48 : vector<8xf32> to vector<8x1xf32>
    %cst_21 = arith.constant 3.200000e+01 : f32
    %50 = vector.broadcast %cst_21 : f32 to vector<8x1xf32>
    %51 = arith.divf %49, %50 : vector<8x1xf32>
    %52 = vector.broadcast %51 : vector<8x1xf32> to vector<8x32xf32>
    %53 = arith.subf %47, %52 : vector<8x32xf32>
    %54 = arith.mulf %53, %53 : vector<8x32xf32>
    %cst_22 = arith.constant dense<0.000000e+00> : vector<8xf32>
    %55 = vector.multi_reduction <add>, %54, %cst_22 [1] : vector<8x32xf32> to vector<8xf32>
    %56 = vector.shape_cast %55 : vector<8xf32> to vector<8x1xf32>
    %cst_23 = arith.constant 3.200000e+01 : f32
    %57 = vector.broadcast %cst_23 : f32 to vector<8x1xf32>
    %58 = arith.divf %56, %57 : vector<8x1xf32>
    %cst_24 = arith.constant 9.99999974E-6 : f32
    %59 = vector.broadcast %cst_24 : f32 to vector<8x1xf32>
    %60 = arith.addf %58, %59 : vector<8x1xf32>
    %61 = math.rsqrt %60 : vector<8x1xf32>
    %62 = vector.broadcast %61 : vector<8x1xf32> to vector<8x32xf32>
    %63 = arith.mulf %53, %62 : vector<8x32xf32>
    %c0_25 = arith.constant 0 : index
    %c0_26 = arith.constant 0 : index
    %64 = vector.load %arg4[%c0_25, %c0_26] : memref<1x32xf32, #tpu.memory_space<vmem>>, vector<1x32xf32>
    %65 = vector.broadcast %64 : vector<1x32xf32> to vector<8x32xf32>
    %66 = arith.mulf %63, %65 : vector<8x32xf32>
    %c0_27 = arith.constant 0 : index
    %c0_28 = arith.constant 0 : index
    %67 = vector.load %arg5[%c0_27, %c0_28] : memref<1x32xf32, #tpu.memory_space<vmem>>, vector<1x32xf32>
    %68 = vector.broadcast %67 : vector<1x32xf32> to vector<8x32xf32>
    %69 = arith.addf %66, %68 : vector<8x32xf32>
    %70 = vector.extract_strided_slice %69 {offsets = [0, 0], sizes = [8, 8], strides = [1, 1]} : vector<8x32xf32> to vector<8x8xf32>
    %71 = vector.shape_cast %70 : vector<8x8xf32> to vector<1x8x8xf32>
    %72 = vector.extract_strided_slice %69 {offsets = [0, 8], sizes = [8, 8], strides = [1, 1]} : vector<8x32xf32> to vector<8x8xf32>
    %73 = vector.shape_cast %72 : vector<8x8xf32> to vector<1x8x8xf32>
    %74 = vector.extract_strided_slice %69 {offsets = [0, 16], sizes = [8, 8], strides = [1, 1]} : vector<8x32xf32> to vector<8x8xf32>
    %75 = vector.shape_cast %74 : vector<8x8xf32> to vector<1x8x8xf32>
    %76 = vector.extract_strided_slice %69 {offsets = [0, 24], sizes = [8, 8], strides = [1, 1]} : vector<8x32xf32> to vector<8x8xf32>
    %77 = vector.shape_cast %76 : vector<8x8xf32> to vector<1x8x8xf32>
    %78 = tpu.concatenate %71, %73, %75, %77 in 1 : vector<1x8x8xf32>, vector<1x8x8xf32>, vector<1x8x8xf32>, vector<1x8x8xf32> -> vector<1x32x8xf32>
    %79 = vector.extract_strided_slice %46 {offsets = [0, 0], sizes = [8, 8], strides = [1, 1]} : vector<8x32xf32> to vector<8x8xf32>
    %80 = vector.shape_cast %79 : vector<8x8xf32> to vector<1x8x8xf32>
    %81 = vector.extract_strided_slice %46 {offsets = [0, 8], sizes = [8, 8], strides = [1, 1]} : vector<8x32xf32> to vector<8x8xf32>
    %82 = vector.shape_cast %81 : vector<8x8xf32> to vector<1x8x8xf32>
    %83 = vector.extract_strided_slice %46 {offsets = [0, 16], sizes = [8, 8], strides = [1, 1]} : vector<8x32xf32> to vector<8x8xf32>
    %84 = vector.shape_cast %83 : vector<8x8xf32> to vector<1x8x8xf32>
    %85 = vector.extract_strided_slice %46 {offsets = [0, 24], sizes = [8, 8], strides = [1, 1]} : vector<8x32xf32> to vector<8x8xf32>
    %86 = vector.shape_cast %85 : vector<8x8xf32> to vector<1x8x8xf32>
    %87 = tpu.concatenate %80, %82, %84, %86 in 1 : vector<1x8x8xf32>, vector<1x8x8xf32>, vector<1x8x8xf32>, vector<1x8x8xf32> -> vector<1x32x8xf32>
    %88 = vector.shape_cast %87 : vector<1x32x8xf32> to vector<4x8x8xf32>
    "tpu.trace_start"() <{level = 10 : i32, message = "bqd,bkd->bqk"}> : () -> ()
    %cst_29 = arith.constant dense<0.000000e+00> : vector<1x32x32xf32>
    %89 = tpu.matmul %78, %78, %cst_29 {dimension_numbers = #tpu.dot_dimension_numbers<[2], [2], [1], [1], [0, 0, 0, 1, 1, 1], [0], [0]>} : vector<1x32x8xf32>, vector<1x32x8xf32>, vector<1x32x32xf32> -> vector<1x32x32xf32>
    "tpu.trace_stop"() : () -> ()
    %c0_30 = arith.constant 0 : index
    %c0_31 = arith.constant 0 : index
    %90 = vector.load %arg6[%c0_30, %c0_31] : memref<32x32xf32, #tpu.memory_space<vmem>>, vector<32x32xf32>
    %91 = vector.shape_cast %90 : vector<32x32xf32> to vector<1x32x32xf32>
    %92 = arith.mulf %89, %91 : vector<1x32x32xf32>
    %c0_32 = arith.constant 0 : index
    %c0_33 = arith.constant 0 : index
    %93 = vector.load %arg7[%c0_32, %c0_33] : memref<32x32xf32, #tpu.memory_space<vmem>>, vector<32x32xf32>
    %94 = vector.shape_cast %93 : vector<32x32xf32> to vector<1x32x32xf32>
    "tpu.trace_start"() <{level = 10 : i32, message = "bqk,bkd->bqd"}> : () -> ()
    %cst_34 = arith.constant dense<0.000000e+00> : vector<1x32x32xf32>
    %95 = tpu.matmul %94, %92, %cst_34 {dimension_numbers = #tpu.dot_dimension_numbers<[2], [1], [1], [2], [0, 0, 0, 1, 1, 2], [0], [0]>} : vector<1x32x32xf32>, vector<1x32x32xf32>, vector<1x32x32xf32> -> vector<1x32x32xf32>
    "tpu.trace_stop"() : () -> ()
    %c0_35 = arith.constant 0 : index
    %c0_36 = arith.constant 0 : index
    %96 = vector.load %arg8[%c0_35, %c0_36] : memref<32x32xf32, #tpu.memory_space<vmem>>, vector<32x32xf32>
    %97 = vector.shape_cast %96 : vector<32x32xf32> to vector<1x32x32xf32>
    %98 = arith.mulf %95, %97 : vector<1x32x32xf32>
    %c0_37 = arith.constant 0 : index
    %c0_38 = arith.constant 0 : index
    %99 = vector.load %arg9[%c0_37, %c0_38] : memref<32x8xf32, #tpu.memory_space<vmem>>, vector<32x8xf32>
    %100 = vector.shape_cast %99 : vector<32x8xf32> to vector<1x32x8xf32>
    "tpu.trace_start"() <{level = 10 : i32, message = "bqk,bkd->bqd"}> : () -> ()
    %cst_39 = arith.constant dense<0.000000e+00> : vector<1x32x8xf32>
    %101 = tpu.matmul %98, %100, %cst_39 {dimension_numbers = #tpu.dot_dimension_numbers<[2], [1], [1], [2], [0, 0, 0, 1, 1, 2], [0], [0]>} : vector<1x32x32xf32>, vector<1x32x8xf32>, vector<1x32x8xf32> -> vector<1x32x8xf32>
    "tpu.trace_stop"() : () -> ()
    %102 = vector.shape_cast %101 : vector<1x32x8xf32> to vector<4x8x8xf32>
    %cst_40 = arith.constant dense<0xFF800000> : vector<4x8xf32>
    %103 = vector.multi_reduction <maximumf>, %102, %cst_40 [2] : vector<4x8x8xf32> to vector<4x8xf32>
    %104 = vector.shape_cast %103 : vector<4x8xf32> to vector<4x8x1xf32>
    %105 = vector.broadcast %104 : vector<4x8x1xf32> to vector<4x8x8xf32>
    %106 = arith.subf %102, %105 : vector<4x8x8xf32>
    %107 = math.exp %106 : vector<4x8x8xf32>
    %cst_41 = arith.constant dense<0.000000e+00> : vector<4x8xf32>
    %108 = vector.multi_reduction <add>, %107, %cst_41 [2] : vector<4x8x8xf32> to vector<4x8xf32>
    %109 = vector.shape_cast %108 : vector<4x8xf32> to vector<4x8x1xf32>
    %110 = tpu.reciprocal %109 {approx = true} : vector<4x8x1xf32> -> vector<4x8x1xf32>
    %111 = vector.broadcast %110 : vector<4x8x1xf32> to vector<4x8x8xf32>
    %112 = arith.mulf %107, %111 : vector<4x8x8xf32>
    "tpu.trace_start"() <{level = 10 : i32, message = "bqk,bkd->bqd"}> : () -> ()
    %cst_42 = arith.constant dense<0.000000e+00> : vector<4x8x8xf32>
    %113 = tpu.matmul %112, %88, %cst_42 {dimension_numbers = #tpu.dot_dimension_numbers<[2], [1], [1], [2], [0, 0, 0, 1, 1, 2], [0], [0]>} : vector<4x8x8xf32>, vector<4x8x8xf32>, vector<4x8x8xf32> -> vector<4x8x8xf32>
    "tpu.trace_stop"() : () -> ()
    %114 = vector.shape_cast %113 : vector<4x8x8xf32> to vector<1x4x8x8xf32>
    %115 = vector.extract_strided_slice %114 {offsets = [0, 0, 0, 0], sizes = [1, 1, 8, 8], strides = [1, 1, 1, 1]} : vector<1x4x8x8xf32> to vector<1x1x8x8xf32>
    %116 = vector.shape_cast %115 : vector<1x1x8x8xf32> to vector<1x8x8xf32>
    %117 = vector.shape_cast %116 : vector<1x8x8xf32> to vector<8x8xf32>
    %118 = vector.extract_strided_slice %114 {offsets = [0, 1, 0, 0], sizes = [1, 1, 8, 8], strides = [1, 1, 1, 1]} : vector<1x4x8x8xf32> to vector<1x1x8x8xf32>
    %119 = vector.shape_cast %118 : vector<1x1x8x8xf32> to vector<1x8x8xf32>
    %120 = vector.shape_cast %119 : vector<1x8x8xf32> to vector<8x8xf32>
    %121 = vector.extract_strided_slice %114 {offsets = [0, 2, 0, 0], sizes = [1, 1, 8, 8], strides = [1, 1, 1, 1]} : vector<1x4x8x8xf32> to vector<1x1x8x8xf32>
    %122 = vector.shape_cast %121 : vector<1x1x8x8xf32> to vector<1x8x8xf32>
    %123 = vector.shape_cast %122 : vector<1x8x8xf32> to vector<8x8xf32>
    %124 = vector.extract_strided_slice %114 {offsets = [0, 3, 0, 0], sizes = [1, 1, 8, 8], strides = [1, 1, 1, 1]} : vector<1x4x8x8xf32> to vector<1x1x8x8xf32>
    %125 = vector.shape_cast %124 : vector<1x1x8x8xf32> to vector<1x8x8xf32>
    %126 = vector.shape_cast %125 : vector<1x8x8xf32> to vector<8x8xf32>
    %127 = tpu.concatenate %117, %120, %123, %126 in 1 : vector<8x8xf32>, vector<8x8xf32>, vector<8x8xf32>, vector<8x8xf32> -> vector<8x32xf32>
    %c0_43 = arith.constant 0 : index
    %c0_44 = arith.constant 0 : index
    %128 = vector.load %arg10[%c0_43, %c0_44] : memref<32x32xf32, #tpu.memory_space<vmem>>, vector<32x32xf32>
    %cst_45 = arith.constant dense<0.000000e+00> : vector<8x32xf32>
    %129 = tpu.matmul %127, %128, %cst_45 {dimension_numbers = #tpu.dot_dimension_numbers<[1], [0], [0], [1], [0, 0, 1, 1], [], []>} : vector<8x32xf32>, vector<32x32xf32>, vector<8x32xf32> -> vector<8x32xf32>
    %c0_46 = arith.constant 0 : index
    %c0_47 = arith.constant 0 : index
    %130 = vector.load %arg11[%c0_46, %c0_47] : memref<1x32xf32, #tpu.memory_space<vmem>>, vector<1x32xf32>
    %131 = vector.broadcast %130 : vector<1x32xf32> to vector<8x32xf32>
    %132 = arith.addf %129, %131 : vector<8x32xf32>
    %c0_48 = arith.constant 0 : index
    %c0_49 = arith.constant 0 : index
    %133 = vector.load %arg12[%c0_48, %c0_49] : memref<8x32xf32, #tpu.memory_space<vmem>>, vector<8x32xf32>
    tpu.vector_store %arg12[%c0_48, %c0_49], %132 {strides = array<i32>} : memref<8x32xf32, #tpu.memory_space<vmem>>, vector<8x32xf32>,
    return
  }
  func.func @transform_0(%arg0: i32) -> (i32, i32) {
    %c0_i32 = arith.constant 0 : i32
    %c0_i32_0 = arith.constant 0 : i32
    return %arg0, %c0_i32 : i32, i32
  }
  func.func @transform_1(%arg0: i32) -> (i32, i32) {
    %c0_i32 = arith.constant 0 : i32
    %c0_i32_0 = arith.constant 0 : i32
    %c0_i32_1 = arith.constant 0 : i32
    return %c0_i32, %c0_i32_0 : i32, i32
  }
  func.func @transform_2(%arg0: i32) -> (i32, i32) {
    %c0_i32 = arith.constant 0 : i32
    %c0_i32_0 = arith.constant 0 : i32
    %c0_i32_1 = arith.constant 0 : i32
    return %c0_i32, %c0_i32_0 : i32, i32
  }
  func.func @transform_3(%arg0: i32) -> (i32, i32) {
    %c0_i32 = arith.constant 0 : i32
    %c0_i32_0 = arith.constant 0 : i32
    %c0_i32_1 = arith.constant 0 : i32
    return %c0_i32, %c0_i32_0 : i32, i32
  }
  func.func @transform_4(%arg0: i32) -> (i32, i32) {
    %c0_i32 = arith.constant 0 : i32
    %c0_i32_0 = arith.constant 0 : i32
    %c0_i32_1 = arith.constant 0 : i32
    return %c0_i32, %c0_i32_0 : i32, i32
  }
  func.func @transform_5(%arg0: i32) -> (i32, i32) {
    %c0_i32 = arith.constant 0 : i32
    %c0_i32_0 = arith.constant 0 : i32
    %c0_i32_1 = arith.constant 0 : i32
    return %c0_i32, %c0_i32_0 : i32, i32
  }
  func.func @transform_6(%arg0: i32) -> (i32, i32) {
    %c0_i32 = arith.constant 0 : i32
    %c0_i32_0 = arith.constant 0 : i32
    %c0_i32_1 = arith.constant 0 : i32
    return %c0_i32, %c0_i32_0 : i32, i32
  }
  func.func @transform_7(%arg0: i32) -> (i32, i32) {
    %c0_i32 = arith.constant 0 : i32
    %c0_i32_0 = arith.constant 0 : i32
    %c0_i32_1 = arith.constant 0 : i32
    return %c0_i32, %c0_i32_0 : i32, i32
  }
  func.func @transform_8(%arg0: i32) -> (i32, i32) {
    %c0_i32 = arith.constant 0 : i32
    %c0_i32_0 = arith.constant 0 : i32
    %c0_i32_1 = arith.constant 0 : i32
    return %c0_i32, %c0_i32_0 : i32, i32
  }
  func.func @transform_9(%arg0: i32) -> (i32, i32) {
    %c0_i32 = arith.constant 0 : i32
    %c0_i32_0 = arith.constant 0 : i32
    %c0_i32_1 = arith.constant 0 : i32
    return %c0_i32, %c0_i32_0 : i32, i32
  }
  func.func @transform_10(%arg0: i32) -> (i32, i32) {
    %c0_i32 = arith.constant 0 : i32
    %c0_i32_0 = arith.constant 0 : i32
    %c0_i32_1 = arith.constant 0 : i32
    return %c0_i32, %c0_i32_0 : i32, i32
  }
  func.func @transform_11(%arg0: i32) -> (i32, i32) {
    %c0_i32 = arith.constant 0 : i32
    %c0_i32_0 = arith.constant 0 : i32
    return %arg0, %c0_i32 : i32, i32
  }
}

</mosaic_0001>

<llo_original>
// kernel: tpu_custom_call.1
$region0: #{tpu_custom_call.1}
  #allocation0 [shape = 'u32[]', space=smem, size = 0x4, offset = 0x4, fixed_abs, tag = 'smem constant byte address 0x4 - core index']
  #allocation1 [shape = 'u32[72,128]{1,0:T(1,128)}', space=vmem, size = 0x9000, scoped, tag = 'internal scratch']
  %s0 = inlined_call_operand.hbm [shape: f32[16,32], index: 0, kind: input, shape index: {}]
  %s1 = inlined_call_operand.vmem [shape: f32[32,64], index: 1, kind: input, shape index: {}]
  %s2 = inlined_call_operand.vmem [shape: f32[1,64], index: 2, kind: input, shape index: {}]
  %s3 = inlined_call_operand.vmem [shape: f32[1,32], index: 3, kind: input, shape index: {}]
  %s4 = inlined_call_operand.vmem [shape: f32[1,32], index: 4, kind: input, shape index: {}]
  %s5 = inlined_call_operand.hbm [shape: f32[32,32], index: 5, kind: input, shape index: {}]
  %s6 = inlined_call_operand.hbm [shape: f32[32,32], index: 6, kind: input, shape index: {}]
  %s7 = inlined_call_operand.hbm [shape: f32[32,32], index: 7, kind: input, shape index: {}]
  %s8 = inlined_call_operand.vmem [shape: f32[32,8], index: 8, kind: input, shape index: {}]
  %s9 = inlined_call_operand.hbm [shape: f32[32,32], index: 9, kind: input, shape index: {}]
  %s10 = inlined_call_operand.vmem [shape: f32[1,32], index: 10, kind: input, shape index: {}]
  %s11 = inlined_call_operand.hbm [shape: f32[16,32], index: 11, kind: output, shape index: {}]
  %s12 = sld [smem:[#allocation0]]
  $region97: #{tpu_custom_call.1} parent=0
    _
  %s14 = ssub.s32 1, %s12
  %s15 = scalar_select 0, %s14, %s12
  $region1: #{tpu_custom_call.1} parent=0
    #allocation2 [shape = 'u8[8192]{0}', space=vmem, size = 0x2000, scoped, tag = 'input window, operand 0']
    #allocation3 [shape = 's32[2]{0}', space=sflag, size = 0x8, scoped, tag = 'scoped memory for tpu_custom_call.1']
    #allocation4 [shape = 's32[2]{0}', space=sflag, size = 0x8, scoped, tag = 'scoped memory for tpu_custom_call.1']
    #allocation5 [shape = 'u8[16384]{0}', space=vmem, size = 0x4000, scoped, tag = 'input window, operand 5, single buffered']
    #allocation6 [shape = 's32[1]{0}', space=sflag, size = 0x4, scoped, tag = 'scoped memory for tpu_custom_call.1']
    #allocation7 [shape = 'u8[16384]{0}', space=vmem, size = 0x4000, scoped, tag = 'input window, operand 6, single buffered']
    #allocation8 [shape = 'u8[16384]{0}', space=vmem, size = 0x4000, scoped, tag = 'input window, operand 7, single buffered']
    #allocation9 [shape = 's32[1]{0}', space=sflag, size = 0x4, scoped, tag = 'scoped memory for tpu_custom_call.1']
    #allocation10 [shape = 'u8[16384]{0}', space=vmem, size = 0x4000, scoped, tag = 'input window, operand 9, single buffered']
    #allocation11 [shape = 'u8[8192]{0}', space=vmem, size = 0x2000, scoped, tag = 'output window, operand 0']
    %16 = vsyncpa [#allocation3], 0
    %s17 = scalar_lea.sflag [#allocation3], 1
    %18 = vsyncpa %s17, 0
    %19 = vsyncpa [#allocation6], 0
    %20 = vsyncpa [#allocation9], 0
    %21 = vsyncpa [#allocation4], 0
    %s22 = scalar_lea.sflag [#allocation4], 1
    %23 = vsyncpa %s22, 0
    loop: start=0, step=1, limit=4
    $region2: #{tpu_custom_call.1} parent=1 // loop_pre_header
      _
    $region3: #{tpu_custom_call.1} parent=1 // loop_header
      %s25 = sphi 0, %s29
      %p26 = scmp.ge.s32.totalorder %s25, 4
      %s35 = sphi 0, %s37
      %s38 = sphi 0, %s35
      %s39 = sphi 0, %s38
      %s55 = sphi 0, %s39
      %s59 = sphi 0, %s59
      %s61 = sphi 0, %s59
      %s62 = sphi 0, %s61
      %s76 = sphi 0, %s62
      %s80 = sphi 0, %s80
      %s82 = sphi 0, %s80
      %s83 = sphi 0, %s82
      %s97 = sphi 0, %s83
      %s101 = sphi 0, %s101
      %s103 = sphi 0, %s101
      %s104 = sphi 0, %s103
      %s118 = sphi 0, %s104
      %s122 = sphi 0, %s122
      %s124 = sphi 0, %s122
      %s125 = sphi 0, %s124
      %s139 = sphi 0, %s125
      %s143 = sphi 0, %s143
      %s145 = sphi 0, %s143
      %s146 = sphi 0, %s145
      %s160 = sphi 0, %s146
      %s164 = sphi 0, %s164
      %s166 = sphi 0, %s164
      %s167 = sphi 0, %s166
      %s181 = sphi 0, %s167
      %s185 = sphi 0, %s185
      %s187 = sphi 0, %s185
      %s188 = sphi 0, %s187
      %s202 = sphi 0, %s188
      %s206 = sphi 0, %s206
      %s208 = sphi 0, %s206
      %s209 = sphi 0, %s208
      %s223 = sphi 0, %s209
      %s227 = sphi 0, %s227
      %s229 = sphi 0, %s227
      %s230 = sphi 0, %s229
      %s244 = sphi 0, %s230
      %s248 = sphi 0, %s248
      %s250 = sphi 0, %s248
      %s251 = sphi 0, %s250
      %s265 = sphi 0, %s251
      %s271 = sphi 0, %s273
      %s274 = sphi 0, %s271
      %s275 = sphi 0, %s274
      %s291 = sphi 0, %s275
    $region4: #{tpu_custom_call.1} parent=1 // loop_header_branch
      %28 = sbr.rel (%p26) target = $region8
    $region5: #{tpu_custom_call.1} parent=1 // loop_body
      %s30 = ssub.s32 %s25, 1
      %s31 = ssub.s32 %s25, 2
      %s32 = sadd.s32 %s25, 1
      %s33 = ssub.s32 %s25, %s32
      %p34 = scmp.eq.s32.totalorder %s33, 0
      %s36 = sadd.s32 %s35, 1
      %s37 = scalar_select %p34, %s35, %s36
      %p40 = pneg %p34
      %p41 = scmp.eq.s32.totalorder %s25, 1
      %p42 = por %p40, %p41
      %p43 = scmp.ne.s32.totalorder %s35, %s38
      %p44 = scmp.eq.s32.totalorder %s25, 0
      %p45 = por %p43, %p44
      %p46 = scmp.ne.s32.totalorder %s35, %s38
      %p47 = scmp.eq.s32.totalorder %s30, 1
      %p48 = por %p46, %p47
      %p49 = scmp.ne.s32.totalorder %s38, %s39
      %p50 = scmp.eq.s32.totalorder %s30, 0
      %p51 = por %p49, %p50
      %p52 = scmp.ne.s32.totalorder %s38, %s39
      %p53 = scmp.eq.s32.totalorder %s31, 1
      %p54 = por %p52, %p53
      %p56 = scmp.ne.s32.totalorder %s39, %s55
      %p57 = scmp.eq.s32.totalorder %s31, 0
      %p58 = por %p56, %p57
      %s60 = sadd.s32 %s59, 1
      %p63 = scmp.eq.s32.totalorder %s25, 1
      %p64 = scmp.ne.s32.totalorder %s59, %s61
      %p65 = scmp.eq.s32.totalorder %s25, 0
      %p66 = por %p64, %p65
      %p67 = scmp.ne.s32.totalorder %s59, %s61
      %p68 = scmp.eq.s32.totalorder %s30, 1
      %p69 = por %p67, %p68
      %p70 = scmp.ne.s32.totalorder %s61, %s62
      %p71 = scmp.eq.s32.totalorder %s30, 0
      %p72 = por %p70, %p71
      %p73 = scmp.ne.s32.totalorder %s61, %s62
      %p74 = scmp.eq.s32.totalorder %s31, 1
      %p75 = por %p73, %p74
      %p77 = scmp.ne.s32.totalorder %s62, %s76
      %p78 = scmp.eq.s32.totalorder %s31, 0
      %p79 = por %p77, %p78
      %s81 = sadd.s32 %s80, 1
      %p84 = scmp.eq.s32.totalorder %s25, 1
      %p85 = scmp.ne.s32.totalorder %s80, %s82
      %p86 = scmp.eq.s32.totalorder %s25, 0
      %p87 = por %p85, %p86
      %p88 = scmp.ne.s32.totalorder %s80, %s82
      %p89 = scmp.eq.s32.totalorder %s30, 1
      %p90 = por %p88, %p89
      %p91 = scmp.ne.s32.totalorder %s82, %s83
      %p92 = scmp.eq.s32.totalorder %s30, 0
      %p93 = por %p91, %p92
      %p94 = scmp.ne.s32.totalorder %s82, %s83
      %p95 = scmp.eq.s32.totalorder %s31, 1
      %p96 = por %p94, %p95
      %p98 = scmp.ne.s32.totalorder %s83, %s97
      %p99 = scmp.eq.s32.totalorder %s31, 0
      %p100 = por %p98, %p99
      %s102 = sadd.s32 %s101, 1
      %p105 = scmp.eq.s32.totalorder %s25, 1
      %p106 = scmp.ne.s32.totalorder %s101, %s103
      %p107 = scmp.eq.s32.totalorder %s25, 0
      %p108 = por %p106, %p107
      %p109 = scmp.ne.s32.totalorder %s101, %s103
      %p110 = scmp.eq.s32.totalorder %s30, 1
      %p111 = por %p109, %p110
      %p112 = scmp.ne.s32.totalorder %s103, %s104
      %p113 = scmp.eq.s32.totalorder %s30, 0
      %p114 = por %p112, %p113
      %p115 = scmp.ne.s32.totalorder %s103, %s104
      %p116 = scmp.eq.s32.totalorder %s31, 1
      %p117 = por %p115, %p116
      %p119 = scmp.ne.s32.totalorder %s104, %s118
      %p120 = scmp.eq.s32.totalorder %s31, 0
      %p121 = por %p119, %p120
      %s123 = sadd.s32 %s122, 1
      %p126 = scmp.eq.s32.totalorder %s25, 1
      %p127 = scmp.ne.s32.totalorder %s122, %s124
      %p128 = scmp.eq.s32.totalorder %s25, 0
      %p129 = por %p127, %p128
      %p130 = scmp.ne.s32.totalorder %s122, %s124
      %p131 = scmp.eq.s32.totalorder %s30, 1
      %p132 = por %p130, %p131
      %p133 = scmp.ne.s32.totalorder %s124, %s125
      %p134 = scmp.eq.s32.totalorder %s30, 0
      %p135 = por %p133, %p134
      %p136 = scmp.ne.s32.totalorder %s124, %s125
      %p137 = scmp.eq.s32.totalorder %s31, 1
      %p138 = por %p136, %p137
      %p140 = scmp.ne.s32.totalorder %s125, %s139
      %p141 = scmp.eq.s32.totalorder %s31, 0
      %p142 = por %p140, %p141
      %s144 = sadd.s32 %s143, 1
      %p147 = scmp.eq.s32.totalorder %s25, 1
      %p148 = scmp.ne.s32.totalorder %s143, %s145
      %p149 = scmp.eq.s32.totalorder %s25, 0
      %p150 = por %p148, %p149
      %p151 = scmp.ne.s32.totalorder %s143, %s145
      %p152 = scmp.eq.s32.totalorder %s30, 1
      %p153 = por %p151, %p152
      %p154 = scmp.ne.s32.totalorder %s145, %s146
      %p155 = scmp.eq.s32.totalorder %s30, 0
      %p156 = por %p154, %p155
      %p157 = scmp.ne.s32.totalorder %s145, %s146
      %p158 = scmp.eq.s32.totalorder %s31, 1
      %p159 = por %p157, %p158
      %p161 = scmp.ne.s32.totalorder %s146, %s160
      %p162 = scmp.eq.s32.totalorder %s31, 0
      %p163 = por %p161, %p162
      %s165 = sadd.s32 %s164, 1
      %p168 = scmp.eq.s32.totalorder %s25, 1
      %p169 = scmp.ne.s32.totalorder %s164, %s166
      %p170 = scmp.eq.s32.totalorder %s25, 0
      %p171 = por %p169, %p170
      %p172 = scmp.ne.s32.totalorder %s164, %s166
      %p173 = scmp.eq.s32.totalorder %s30, 1
      %p174 = por %p172, %p173
      %p175 = scmp.ne.s32.totalorder %s166, %s167
      %p176 = scmp.eq.s32.totalorder %s30, 0
      %p177 = por %p175, %p176
      %p178 = scmp.ne.s32.totalorder %s166, %s167
      %p179 = scmp.eq.s32.totalorder %s31, 1
      %p180 = por %p178, %p179
      %p182 = scmp.ne.s32.totalorder %s167, %s181
      %p183 = scmp.eq.s32.totalorder %s31, 0
      %p184 = por %p182, %p183
      %s186 = sadd.s32 %s185, 1
      %p189 = scmp.eq.s32.totalorder %s25, 1
      %p190 = scmp.ne.s32.totalorder %s185, %s187
      %p191 = scmp.eq.s32.totalorder %s25, 0
      %p192 = por %p190, %p191
      %p193 = scmp.ne.s32.totalorder %s185, %s187
      %p194 = scmp.eq.s32.totalorder %s30, 1
      %p195 = por %p193, %p194
      %p196 = scmp.ne.s32.totalorder %s187, %s188
      %p197 = scmp.eq.s32.totalorder %s30, 0
      %p198 = por %p196, %p197
      %p199 = scmp.ne.s32.totalorder %s187, %s188
      %p200 = scmp.eq.s32.totalorder %s31, 1
      %p201 = por %p199, %p200
      %p203 = scmp.ne.s32.totalorder %s188, %s202
      %p204 = scmp.eq.s32.totalorder %s31, 0
      %p205 = por %p203, %p204
      %s207 = sadd.s32 %s206, 1
      %p210 = scmp.eq.s32.totalorder %s25, 1
      %p211 = scmp.ne.s32.totalorder %s206, %s208
      %p212 = scmp.eq.s32.totalorder %s25, 0
      %p213 = por %p211, %p212
      %p214 = scmp.ne.s32.totalorder %s206, %s208
      %p215 = scmp.eq.s32.totalorder %s30, 1
      %p216 = por %p214, %p215
      %p217 = scmp.ne.s32.totalorder %s208, %s209
      %p218 = scmp.eq.s32.totalorder %s30, 0
      %p219 = por %p217, %p218
      %p220 = scmp.ne.s32.totalorder %s208, %s209
      %p221 = scmp.eq.s32.totalorder %s31, 1
      %p222 = por %p220, %p221
      %p224 = scmp.ne.s32.totalorder %s209, %s223
      %p225 = scmp.eq.s32.totalorder %s31, 0
      %p226 = por %p224, %p225
      %s228 = sadd.s32 %s227, 1
      %p231 = scmp.eq.s32.totalorder %s25, 1
      %p232 = scmp.ne.s32.totalorder %s227, %s229
      %p233 = scmp.eq.s32.totalorder %s25, 0
      %p234 = por %p232, %p233
      %p235 = scmp.ne.s32.totalorder %s227, %s229
      %p236 = scmp.eq.s32.totalorder %s30, 1
      %p237 = por %p235, %p236
      %p238 = scmp.ne.s32.totalorder %s229, %s230
      %p239 = scmp.eq.s32.totalorder %s30, 0
      %p240 = por %p238, %p239
      %p241 = scmp.ne.s32.totalorder %s229, %s230
      %p242 = scmp.eq.s32.totalorder %s31, 1
      %p243 = por %p241, %p242
      %p245 = scmp.ne.s32.totalorder %s230, %s244
      %p246 = scmp.eq.s32.totalorder %s31, 0
      %p247 = por %p245, %p246
      %s249 = sadd.s32 %s248, 1
      %p252 = scmp.eq.s32.totalorder %s25, 1
      %p253 = scmp.ne.s32.totalorder %s248, %s250
      %p254 = scmp.eq.s32.totalorder %s25, 0
      %p255 = por %p253, %p254
      %p256 = scmp.ne.s32.totalorder %s248, %s250
      %p257 = scmp.eq.s32.totalorder %s30, 1
      %p258 = por %p256, %p257
      %p259 = scmp.ne.s32.totalorder %s250, %s251
      %p260 = scmp.eq.s32.totalorder %s30, 0
      %p261 = por %p259, %p260
      %p262 = scmp.ne.s32.totalorder %s250, %s251
      %p263 = scmp.eq.s32.totalorder %s31, 1
      %p264 = por %p262, %p263
      %p266 = scmp.ne.s32.totalorder %s251, %s265
      %p267 = scmp.eq.s32.totalorder %s31, 0
      %p268 = por %p266, %p267
      %s269 = ssub.s32 %s25, %s32
      %p270 = scmp.eq.s32.totalorder %s269, 0
      %s272 = sadd.s32 %s271, 1
      %s273 = scalar_select %p270, %s271, %s272
      %p276 = pneg %p270
      %p277 = scmp.eq.s32.totalorder %s25, 1
      %p278 = por %p276, %p277
      %p279 = scmp.ne.s32.totalorder %s271, %s274
      %p280 = scmp.eq.s32.totalorder %s25, 0
      %p281 = por %p279, %p280
      %p282 = scmp.ne.s32.totalorder %s271, %s274
      %p283 = scmp.eq.s32.totalorder %s30, 1
      %p284 = por %p282, %p283
      %p285 = scmp.ne.s32.totalorder %s274, %s275
      %p286 = scmp.eq.s32.totalorder %s30, 0
      %p287 = por %p285, %p286
      %p288 = scmp.ne.s32.totalorder %s274, %s275
      %p289 = scmp.eq.s32.totalorder %s31, 1
      %p290 = por %p288, %p289
      %p292 = scmp.ne.s32.totalorder %s275, %s291
      %p293 = scmp.eq.s32.totalorder %s31, 0
      %p294 = por %p292, %p293
      %p295 = scmp.le.s32.totalorder 1, %s25
      %p296 = scmp.lt.s32.totalorder %s25, 3
      %p297 = pnand %p295, %p296
      %p298 = pneg %p297
      // Predicated region
      $region9: #{tpu_custom_call.1} parent=5 // pred_check
        _
      $region10: #{tpu_custom_call.1} parent=5 // pred_check_branch
        %300 = sbr.rel (%p297) target = $region12
      $region11: #{tpu_custom_call.1} parent=5 // pred_region
        %s301 = ssub.s32 %s25, 1
        // Predicated region
        $region13: #{tpu_custom_call.1} parent=11 // pred_check
          %p302 = pneg %p72
        $region14: #{tpu_custom_call.1} parent=11 // pred_check_branch
          %304 = sbr.rel (%p302) target = $region16
        $region15: #{tpu_custom_call.1} parent=11 // pred_region
          _
        $region16: #{tpu_custom_call.1} parent=11 // pred_fallthru
          _
        // Predicated region
        $region17: #{tpu_custom_call.1} parent=11 // pred_check
          %p305 = pneg %p93
        $region18: #{tpu_custom_call.1} parent=11 // pred_check_branch
          %307 = sbr.rel (%p305) target = $region20
        $region19: #{tpu_custom_call.1} parent=11 // pred_region
          _
        $region20: #{tpu_custom_call.1} parent=11 // pred_fallthru
          _
        // Predicated region
        $region21: #{tpu_custom_call.1} parent=11 // pred_check
          %p308 = pneg %p114
        $region22: #{tpu_custom_call.1} parent=11 // pred_check_branch
          %310 = sbr.rel (%p308) target = $region24
        $region23: #{tpu_custom_call.1} parent=11 // pred_region
          _
        $region24: #{tpu_custom_call.1} parent=11 // pred_fallthru
          _
        // Predicated region
        $region25: #{tpu_custom_call.1} parent=11 // pred_check
          %p311 = pneg %p135
        $region26: #{tpu_custom_call.1} parent=11 // pred_check_branch
          %313 = sbr.rel (%p311) target = $region28
        $region27: #{tpu_custom_call.1} parent=11 // pred_region
          _
        $region28: #{tpu_custom_call.1} parent=11 // pred_fallthru
          _
        // Predicated region
        $region29: #{tpu_custom_call.1} parent=11 // pred_check
          %p314 = pneg %p156
        $region30: #{tpu_custom_call.1} parent=11 // pred_check_branch
          %316 = sbr.rel (%p314) target = $region32
        $region31: #{tpu_custom_call.1} parent=11 // pred_region
          %318 = vsyncadd [#allocation6], 0
          %s319 = sshll.u32 %s5, 4
          %s320 = int_to_ptr.hbm [resolvable:$true] %s319
          %s321 = sshll.u32 [#allocation5], 4
          %s322 = int_to_ptr.vmem [resolvable:$true] %s321
          %327 = dma.hbm_to_vmem [thread:$0]  %s320, 512, %s322, [#allocation6], 128, 128, 8
        $region32: #{tpu_custom_call.1} parent=11 // pred_fallthru
          _
        // Predicated region
        $region33: #{tpu_custom_call.1} parent=11 // pred_check
          %p328 = pneg %p177
        $region34: #{tpu_custom_call.1} parent=11 // pred_check_branch
          %330 = sbr.rel (%p328) target = $region36
        $region35: #{tpu_custom_call.1} parent=11 // pred_region
          %332 = vsyncadd [#allocation6], 0
          %s333 = sshll.u32 %s6, 4
          %s334 = int_to_ptr.hbm [resolvable:$true] %s333
          %s335 = sshll.u32 [#allocation7], 4
          %s336 = int_to_ptr.vmem [resolvable:$true] %s335
          %341 = dma.hbm_to_vmem [thread:$0]  %s334, 512, %s336, [#allocation6], 128, 128, 8
        $region36: #{tpu_custom_call.1} parent=11 // pred_fallthru
          _
        // Predicated region
        $region37: #{tpu_custom_call.1} parent=11 // pred_check
          %p342 = pneg %p198
        $region38: #{tpu_custom_call.1} parent=11 // pred_check_branch
          %344 = sbr.rel (%p342) target = $region40
        $region39: #{tpu_custom_call.1} parent=11 // pred_region
          %346 = vsyncadd [#allocation9], 0
          %s347 = sshll.u32 %s7, 4
          %s348 = int_to_ptr.hbm [resolvable:$true] %s347
          %s349 = sshll.u32 [#allocation8], 4
          %s350 = int_to_ptr.vmem [resolvable:$true] %s349
          %355 = dma.hbm_to_vmem [thread:$0]  %s348, 512, %s350, [#allocation9], 128, 128, 8
        $region40: #{tpu_custom_call.1} parent=11 // pred_fallthru
          _
        // Predicated region
        $region41: #{tpu_custom_call.1} parent=11 // pred_check
          %p356 = pneg %p219
        $region42: #{tpu_custom_call.1} parent=11 // pred_check_branch
          %358 = sbr.rel (%p356) target = $region44
        $region43: #{tpu_custom_call.1} parent=11 // pred_region
          _
        $region44: #{tpu_custom_call.1} parent=11 // pred_fallthru
          _
        // Predicated region
        $region45: #{tpu_custom_call.1} parent=11 // pred_check
          %p359 = pneg %p240
        $region46: #{tpu_custom_call.1} parent=11 // pred_check_branch
          %361 = sbr.rel (%p359) target = $region48
        $region47: #{tpu_custom_call.1} parent=11 // pred_region
          %363 = vsyncadd [#allocation9], 0
          %s364 = sshll.u32 %s9, 4
          %s365 = int_to_ptr.hbm [resolvable:$true] %s364
          %s366 = sshll.u32 [#allocation10], 4
          %s367 = int_to_ptr.vmem [resolvable:$true] %s366
          %372 = dma.hbm_to_vmem [thread:$0]  %s365, 512, %s367, [#allocation9], 128, 128, 8
        $region48: #{tpu_custom_call.1} parent=11 // pred_fallthru
          _
        // Predicated region
        $region49: #{tpu_custom_call.1} parent=11 // pred_check
          %p373 = pneg %p261
        $region50: #{tpu_custom_call.1} parent=11 // pred_check_branch
          %375 = sbr.rel (%p373) target = $region52
        $region51: #{tpu_custom_call.1} parent=11 // pred_region
          _
        $region52: #{tpu_custom_call.1} parent=11 // pred_fallthru
          _
      $region12: #{tpu_custom_call.1} parent=5 // pred_fallthru
        _
      %p376 = scmp.lt.s32.totalorder %s25, 2
      // Predicated region
      $region53: #{tpu_custom_call.1} parent=5 // pred_check
        %p377 = pneg %p376
      $region54: #{tpu_custom_call.1} parent=5 // pred_check_branch
        %379 = sbr.rel (%p377) target = $region56
      $region55: #{tpu_custom_call.1} parent=5 // pred_region
        // Predicated region
        $region57: #{tpu_custom_call.1} parent=55 // pred_check
          %p380 = pneg %p45
        $region58: #{tpu_custom_call.1} parent=55 // pred_check_branch
          %382 = sbr.rel (%p380) target = $region60
        $region59: #{tpu_custom_call.1} parent=55 // pred_region
          %s383 = sand.u32 %s35, 1
          %s384 = scalar_lea.sflag [#allocation3], %s383
          %s385 = sand.u32 %s35, 1
          %s386 = smul.addr %s385, 8
          %s387 = scalar_lea.vmem [#allocation2], %s386
          %389 = vsyncadd %s384, 0
          %s390 = smul.addr %s25, 8
          %s391 = scalar_lea.hbm %s0, %s390
          %s393 = sshll.u32 %s391, 4
          %s394 = int_to_ptr.hbm [resolvable:$true] %s393
          %s395 = sshll.u32 %s387, 4
          %s396 = int_to_ptr.vmem [resolvable:$true] %s395
          %398 = dma.hbm_to_vmem [thread:$0]  %s394, 128, %s396, %s384
        $region60: #{tpu_custom_call.1} parent=55 // pred_fallthru
          _
      $region56: #{tpu_custom_call.1} parent=5 // pred_fallthru
        _
      %p399 = scmp.le.s32.totalorder 1, %s25
      %p400 = scmp.lt.s32.totalorder %s25, 3
      %p401 = pnand %p399, %p400
      %p402 = pneg %p401
      // Predicated region
      $region61: #{tpu_custom_call.1} parent=5 // pred_check
        _
      $region62: #{tpu_custom_call.1} parent=5 // pred_check_branch
        %404 = sbr.rel (%p401) target = $region64
      $region63: #{tpu_custom_call.1} parent=5 // pred_region
        %s405 = ssub.s32 %s25, 1
        %s406 = sand.u32 %s38, 1
        %s407 = scalar_lea.sflag [#allocation3], %s406
        %s408 = sand.u32 %s38, 1
        %s409 = smul.addr %s408, 8
        %s410 = scalar_lea.vmem [#allocation2], %s409
        // Predicated region
        $region65: #{tpu_custom_call.1} parent=63 // pred_check
          %p411 = pneg %p51
        $region66: #{tpu_custom_call.1} parent=63 // pred_check_branch
          %413 = sbr.rel (%p411) target = $region68
        $region67: #{tpu_custom_call.1} parent=63 // pred_region
          %415 = dma.done %s407, 128
        $region68: #{tpu_custom_call.1} parent=63 // pred_fallthru
          _
        // Predicated region
        $region69: #{tpu_custom_call.1} parent=63 // pred_check
          %p416 = pneg %p156
        $region70: #{tpu_custom_call.1} parent=63 // pred_check_branch
          %418 = sbr.rel (%p416) target = $region72
        $region71: #{tpu_custom_call.1} parent=63 // pred_region
          %420 = dma.done [#allocation6], 512
        $region72: #{tpu_custom_call.1} parent=63 // pred_fallthru
          _
        // Predicated region
        $region73: #{tpu_custom_call.1} parent=63 // pred_check
          %p421 = pneg %p177
        $region74: #{tpu_custom_call.1} parent=63 // pred_check_branch
          %423 = sbr.rel (%p421) target = $region76
        $region75: #{tpu_custom_call.1} parent=63 // pred_region
          %425 = dma.done [#allocation6], 512
        $region76: #{tpu_custom_call.1} parent=63 // pred_fallthru
          _
        // Predicated region
        $region77: #{tpu_custom_call.1} parent=63 // pred_check
          %p426 = pneg %p198
        $region78: #{tpu_custom_call.1} parent=63 // pred_check_branch
          %428 = sbr.rel (%p426) target = $region80
        $region79: #{tpu_custom_call.1} parent=63 // pred_region
          %430 = dma.done [#allocation9], 512
        $region80: #{tpu_custom_call.1} parent=63 // pred_fallthru
          _
        // Predicated region
        $region81: #{tpu_custom_call.1} parent=63 // pred_check
          %p431 = pneg %p240
        $region82: #{tpu_custom_call.1} parent=63 // pred_check_branch
          %433 = sbr.rel (%p431) target = $region84
        $region83: #{tpu_custom_call.1} parent=63 // pred_region
          %435 = dma.done [#allocation9], 512
        $region84: #{tpu_custom_call.1} parent=63 // pred_fallthru
          _
        %s436 = sand.u32 %s38, 1
        %s437 = scalar_lea.sflag [#allocation3], %s436
        %s438 = sand.u32 %s38, 1
        %s439 = smul.addr %s438, 8
        %s440 = scalar_lea.vmem [#allocation2], %s439
        %p441 = pneg %p51
        %p442 = pneg %p48
        %p443 = pneg %p72
        %p444 = pneg %p69
        %p445 = pneg %p93
        %p446 = pneg %p90
        %p447 = pneg %p114
        %p448 = pneg %p111
        %p449 = pneg %p135
        %p450 = pneg %p132
        %p451 = pneg %p156
        %p452 = pneg %p153
        %p453 = pneg %p177
        %p454 = pneg %p174
        %p455 = pneg %p198
        %p456 = pneg %p195
        %p457 = pneg %p219
        %p458 = pneg %p216
        %p459 = pneg %p240
        %p460 = pneg %p237
        %p461 = pneg %p261
        %p462 = pneg %p258
        %p463 = pneg %p287
        %p464 = pneg %p284
        %s465 = sand.u32 %s274, 1
        %s466 = scalar_lea.sflag [#allocation4], %s465
        %s467 = sand.u32 %s274, 1
        %s468 = smul.addr %s467, 8
        %s469 = scalar_lea.vmem [#allocation11], %s468
        %v470 = vld [vmem:[%s410] sm:$0xff]
        %v471 = vld [vmem:[%s1] sm:$0xff]
        %v472 = vld [vmem:[%s1 + $0x8] sm:$0xff]
        %v473 = vld [vmem:[%s1 + $0x10] sm:$0xff]
        %v474 = vld [vmem:[%s1 + $0x18] sm:$0xff]
        %v475 = vld [vmem:[%s2] sm:$0x1]
        %v477 = vperm.slane %v475, 0
        %vm479 = vcmask 261120
        %v481 = vsel %vm479, %v470, 0
        %483 = vmatpush.msra.mxu0 0.0
        %484 = vmatpush.msra.mxu0 0.0
        %485 = vmatpush.msra.mxu0 0.0
        %486 = vmatpush.msra.mxu0 0.0
        %487 = vmatpush.msra.mxu0 0.0
        %488 = vmatpush.msra.mxu0 0.0
        %489 = vmatpush.msra.mxu0 0.0
        %490 = vmatpush.msra.mxu0 0.0
        %491 = vmatpush.msra.mxu0 0.0
        %492 = vmatpush.msra.mxu0 0.0
        %493 = vmatpush.msra.mxu0 0.0
        %494 = vmatpush.msra.mxu0 0.0
        %495 = vmatpush.msra.mxu0 %v474
        %496 = vmatpush.msra.mxu0 %v473
        %497 = vmatpush.msra.mxu0 %v472
        %498 = vmatpush.msra.mxu0 %v471
        %499 = vmatmul.f32.gmra.mxu0 %v481
        %v500 = vpop.f32.mrf.mxu0
        %v501 = vadd.f32 %v477, %v500
        %502 = vdwg.mxu0
        %v503 = vmul.f32 %v501, 0.5
        %v504 = vmul.f32 %v501, 0.70710677
        %vm505 = vcmp.ge.f32.partialorder %v504, 0.0
        %v506 = vsel %vm505, 1.0, -1.0
        %v507 = vand.u32 2147483647, %v504
        %v508 = vmul.f32 %v507, 0.3275911
        %v509 = vadd.f32 %v508, 1.0
        %v510 = vrcp.pop %v509
        %v511 = vmul.f32 %v510, 1.0614054
        %v512 = vadd.f32 %v511, -1.4531521
        %v513 = vmul.f32 %v512, %v510
        %v514 = vadd.f32 %v513, 1.4214138
        %v515 = vmul.f32 %v514, %v510
        %v516 = vadd.f32 %v515, -0.28449672
        %v517 = vmul.f32 %v516, %v510
        %v518 = vadd.f32 %v517, 0.2548296
        %v519 = vmul.f32 %v518, %v510
        %v520 = vsub.f32 0.0, %v507
        %v521 = vmul.f32 %v520, %v507
        %v522 = vmul.f32 %v521, 1.442695
        %v523 = vpow.pop %v522
        %v524 = vmul.f32 %v519, %v523
        %v525 = vsub.f32 1.0, %v524
        %v526 = vmul.f32 %v506, %v525
        %v527 = vadd.f32 %v526, 1.0
        %v528 = vmul.f32 %v503, %v527
        %530 = vrot.lane.b32.xlu0 %v528, 96
        %v531 = vpop.permute.xlu0 %530
        %v533 = vsel %vm479, %v531, 0.0
        %534 = vadd.xlane.f32.xlu0 %v533
        %v535 = vpop.xlane.xlu0 %534
        %v536 = vrcp.pop 32.0
        %v537 = vmul.f32 32.0, %v536
        %v538 = vsub.f32 1.0, %v537
        %v539 = vmul.f32 %v536, %v538
        %v540 = vadd.f32 %v536, %v539
        %vm541 = vweird.f32 %v536
        %v542 = vsel %vm541, %v536, %v540
        %v543 = vmul.f32 %v535, %v542
        %v544 = vsub.f32 %v528, %v543
        %v545 = vmul.f32 %v544, %v544
        %547 = vrot.lane.b32.xlu0 %v545, 96
        %v548 = vpop.permute.xlu0 %547
        %v550 = vsel %vm479, %v548, 0.0
        %551 = vadd.xlane.f32.xlu0 %v550
        %v552 = vpop.xlane.xlu0 %551
        %v553 = vmul.f32 %v552, %v542
        %v554 = vadd.f32 %v553, 1e-05
        %v555 = vrsqrt.pop %v554
        %v556 = vmul.f32 %v555, %v554
        %v557 = vmul.f32 %v556, %v555
        %v558 = vmul.f32 0.5, %v557
        %v559 = vsub.f32 1.5, %v558
        %v560 = vmul.f32 %v555, %v559
        %vm561 = vweird.f32 %v554
        %vm562 = vweird.f32 %v555
        %vm563 = vmor %vm561, %vm562
        %v564 = vsel %vm563, %v555, %v560
        %v565 = vmul.f32 %v544, %v564
        %v566 = vld [vmem:[%s3] sm:$0x1]
        %v568 = vperm.slane %v566, 0
        %569 = vrot.lane.b32.xlu0 %v568, 32
        %v570 = vpop.permute.xlu0 %569
        %v572 = vmul.f32 %v565, %v570
        %v573 = vld [vmem:[%s4] sm:$0x1]
        %v575 = vperm.slane %v573, 0
        %576 = vrot.lane.b32.xlu0 %v575, 32
        %v577 = vpop.permute.xlu0 %576
        %v579 = vadd.f32 %v572, %v577
        %581 = vrot.lane.b32.xlu0 %v579, 120
        %v582 = vpop.permute.xlu0 %581
        %583 = vrot.lane.b32.xlu0 %v579, 112
        %v584 = vpop.permute.xlu0 %583
        %585 = vrot.lane.b32.xlu0 %v579, 104
        %v586 = vpop.permute.xlu0 %585
        %587 = vrot.lane.b32.xlu0 %v528, 120
        %v588 = vpop.permute.xlu0 %587
        %590 = vrot.lane.b32.xlu0 %v528, 112
        %v591 = vpop.permute.xlu0 %590
        %593 = vrot.lane.b32.xlu0 %v528, 104
        %v594 = vpop.permute.xlu0 %593
        %596 = vrot.lane.b32.xlu0 %v579, 96
        %v597 = vpop.permute.xlu0 %596
        %598 = vrot.lane.b32.xlu0 %v582, 96
        %v599 = vpop.permute.xlu0 %598
        %600 = vrot.lane.b32.xlu0 %v584, 96
        %v601 = vpop.permute.xlu0 %600
        %602 = vrot.lane.b32.xlu0 %v586, 96
        %v603 = vpop.permute.xlu0 %602
        %vm604 = vcmask 64512
        %v605 = vsel %vm604, %v597, 0
        %v607 = vsel %vm604, %v599, 0
        %v609 = vsel %vm604, %v601, 0
        %v611 = vsel %vm604, %v603, 0
        %613 = vmatpush.xpose.msra.mxu0 0.0
        %614 = vmatpush.xpose.msra.mxu0 0.0
        %615 = vmatpush.xpose.msra.mxu0 0.0
        %616 = vmatpush.xpose.msra.mxu0 0.0
        %617 = vmatpush.xpose.msra.mxu0 0.0
        %618 = vmatpush.xpose.msra.mxu0 0.0
        %619 = vmatpush.xpose.msra.mxu0 0.0
        %620 = vmatpush.xpose.msra.mxu0 0.0
        %621 = vmatpush.xpose.msra.mxu0 0.0
        %622 = vmatpush.xpose.msra.mxu0 0.0
        %623 = vmatpush.xpose.msra.mxu0 0.0
        %624 = vmatpush.xpose.msra.mxu0 0.0
        %625 = vmatpush.xpose.msra.mxu0 %v611
        %626 = vmatpush.xpose.msra.mxu0 %v609
        %627 = vmatpush.xpose.msra.mxu0 %v607
        %628 = vmatpush.xpose.msra.mxu0 %v605
        %629 = vmatmul.f32.gmra.mxu0 %v605
        %v630 = vpop.f32.mrf.mxu0
        %v631 = vadd.f32 0.0, %v630
        %632 = vmatmul.f32.gmra.mxu0 %v607
        %v633 = vpop.f32.mrf.mxu0
        %v634 = vadd.f32 0.0, %v633
        %635 = vmatmul.f32.gmra.mxu0 %v609
        %v636 = vpop.f32.mrf.mxu0
        %v637 = vadd.f32 0.0, %v636
        %638 = vmatmul.f32.gmra.mxu0 %v611
        %v639 = vpop.f32.mrf.mxu0
        %v640 = vadd.f32 0.0, %v639
        %641 = vdwg.mxu0
        %v642 = vld [vmem:[#allocation5] sm:$0xff]
        %v643 = vld [vmem:[#allocation5 + $0x8] sm:$0xff]
        %v644 = vld [vmem:[#allocation5 + $0x10] sm:$0xff]
        %v645 = vld [vmem:[#allocation5 + $0x18] sm:$0xff]
        %v646 = vmul.f32 %v631, %v642
        %v647 = vmul.f32 %v634, %v643
        %v648 = vmul.f32 %v637, %v644
        %v649 = vmul.f32 %v640, %v645
        %v650 = vld [vmem:[#allocation7] sm:$0xff]
        %v651 = vld [vmem:[#allocation7 + $0x8] sm:$0xff]
        %v652 = vld [vmem:[#allocation7 + $0x10] sm:$0xff]
        %v653 = vld [vmem:[#allocation7 + $0x18] sm:$0xff]
        %v655 = vsel %vm479, %v650, 0
        %v658 = vsel %vm479, %v651, 0
        %v661 = vsel %vm479, %v652, 0
        %v664 = vsel %vm479, %v653, 0
        %666 = vmatpush.msra.mxu0 0.0
        %667 = vmatpush.msra.mxu0 0.0
        %668 = vmatpush.msra.mxu0 0.0
        %669 = vmatpush.msra.mxu0 0.0
        %670 = vmatpush.msra.mxu0 0.0
        %671 = vmatpush.msra.mxu0 0.0
        %672 = vmatpush.msra.mxu0 0.0
        %673 = vmatpush.msra.mxu0 0.0
        %674 = vmatpush.msra.mxu0 0.0
        %675 = vmatpush.msra.mxu0 0.0
        %676 = vmatpush.msra.mxu0 0.0
        %677 = vmatpush.msra.mxu0 0.0
        %678 = vmatpush.msra.mxu0 %v649
        %679 = vmatpush.msra.mxu0 %v648
        %680 = vmatpush.msra.mxu0 %v647
        %681 = vmatpush.msra.mxu0 %v646
        %682 = vmatmul.f32.gmra.mxu0 %v655
        %v683 = vpop.f32.mrf.mxu0
        %v684 = vadd.f32 0.0, %v683
        %685 = vmatmul.f32.gmra.mxu0 %v658
        %v686 = vpop.f32.mrf.mxu0
        %v687 = vadd.f32 0.0, %v686
        %688 = vmatmul.f32.gmra.mxu0 %v661
        %v689 = vpop.f32.mrf.mxu0
        %v690 = vadd.f32 0.0, %v689
        %691 = vmatmul.f32.gmra.mxu0 %v664
        %v692 = vpop.f32.mrf.mxu0
        %v693 = vadd.f32 0.0, %v692
        %694 = vdwg.mxu0
        %v695 = vld [vmem:[#allocation8] sm:$0xff]
        %v696 = vld [vmem:[#allocation8 + $0x8] sm:$0xff]
        %v697 = vld [vmem:[#allocation8 + $0x10] sm:$0xff]
        %v698 = vld [vmem:[#allocation8 + $0x18] sm:$0xff]
        %v699 = vmul.f32 %v684, %v695
        %v700 = vmul.f32 %v687, %v696
        %v701 = vmul.f32 %v690, %v697
        %v702 = vmul.f32 %v693, %v698
        %v703 = vld [vmem:[%s8] sm:$0xff]
        %v704 = vld [vmem:[%s8 + $0x8] sm:$0xff]
        %v705 = vld [vmem:[%s8 + $0x10] sm:$0xff]
        %v706 = vld [vmem:[%s8 + $0x18] sm:$0xff]
        %v708 = vsel %vm479, %v699, 0
        %v711 = vsel %vm479, %v700, 0
        %v714 = vsel %vm479, %v701, 0
        %v717 = vsel %vm479, %v702, 0
        %719 = vmatpush.msra.mxu0 0.0
        %720 = vmatpush.msra.mxu0 0.0
        %721 = vmatpush.msra.mxu0 0.0
        %722 = vmatpush.msra.mxu0 0.0
        %723 = vmatpush.msra.mxu0 0.0
        %724 = vmatpush.msra.mxu0 0.0
        %725 = vmatpush.msra.mxu0 0.0
        %726 = vmatpush.msra.mxu0 0.0
        %727 = vmatpush.msra.mxu0 0.0
        %728 = vmatpush.msra.mxu0 0.0
        %729 = vmatpush.msra.mxu0 0.0
        %730 = vmatpush.msra.mxu0 0.0
        %731 = vmatpush.msra.mxu0 %v706
        %732 = vmatpush.msra.mxu0 %v705
        %733 = vmatpush.msra.mxu0 %v704
        %734 = vmatpush.msra.mxu0 %v703
        %735 = vmatmul.f32.gmra.mxu0 %v708
        %v736 = vpop.f32.mrf.mxu0
        %v737 = vadd.f32 0.0, %v736
        %738 = vmatmul.f32.gmra.mxu0 %v711
        %v739 = vpop.f32.mrf.mxu0
        %v740 = vadd.f32 0.0, %v739
        %741 = vmatmul.f32.gmra.mxu0 %v714
        %v742 = vpop.f32.mrf.mxu0
        %v743 = vadd.f32 0.0, %v742
        %744 = vmatmul.f32.gmra.mxu0 %v717
        %v745 = vpop.f32.mrf.mxu0
        %v746 = vadd.f32 0.0, %v745
        %747 = vdwg.mxu0
        %v748 = vsel %vm604, %v737, -inf
        %749 = vmax.xlane.f32.xlu0 %v748
        %v750 = vpop.xlane.xlu0 %749
        %v751 = vsel %vm604, %v740, -inf
        %752 = vmax.xlane.f32.xlu0 %v751
        %v753 = vpop.xlane.xlu0 %752
        %v754 = vsel %vm604, %v743, -inf
        %755 = vmax.xlane.f32.xlu0 %v754
        %v756 = vpop.xlane.xlu0 %755
        %v757 = vsel %vm604, %v746, -inf
        %758 = vmax.xlane.f32.xlu0 %v757
        %v759 = vpop.xlane.xlu0 %758
        %v760 = vsub.f32 %v737, %v750
        %v761 = vsub.f32 %v740, %v753
        %v762 = vsub.f32 %v743, %v756
        %v763 = vsub.f32 %v746, %v759
        %v764 = vmul.f32 %v760, 1.442695
        %v765 = vpow.pop %v764
        %v766 = vmul.f32 %v761, 1.442695
        %v767 = vpow.pop %v766
        %v768 = vmul.f32 %v762, 1.442695
        %v769 = vpow.pop %v768
        %v770 = vmul.f32 %v763, 1.442695
        %v771 = vpow.pop %v770
        %v772 = vsel %vm604, %v765, 0.0
        %773 = vadd.xlane.f32.xlu0 %v772
        %v774 = vpop.xlane.xlu0 %773
        %v775 = vsel %vm604, %v767, 0.0
        %776 = vadd.xlane.f32.xlu0 %v775
        %v777 = vpop.xlane.xlu0 %776
        %v778 = vsel %vm604, %v769, 0.0
        %779 = vadd.xlane.f32.xlu0 %v778
        %v780 = vpop.xlane.xlu0 %779
        %v781 = vsel %vm604, %v771, 0.0
        %782 = vadd.xlane.f32.xlu0 %v781
        %v783 = vpop.xlane.xlu0 %782
        %v784 = vrcp.pop %v774
        %v785 = vrcp.pop %v777
        %v786 = vrcp.pop %v780
        %v787 = vrcp.pop %v783
        %v788 = vmul.f32 %v765, %v784
        %v789 = vmul.f32 %v767, %v785
        %v790 = vmul.f32 %v769, %v786
        %v791 = vmul.f32 %v771, %v787
        %v793 = vsel %vm604, %v788, 0
        %795 = vmatpush.msra.mxu0 0.0
        %796 = vmatpush.msra.mxu0 0.0
        %797 = vmatpush.msra.mxu0 0.0
        %798 = vmatpush.msra.mxu0 0.0
        %799 = vmatpush.msra.mxu0 0.0
        %800 = vmatpush.msra.mxu0 0.0
        %801 = vmatpush.msra.mxu0 0.0
        %802 = vmatpush.msra.mxu0 0.0
        %803 = vmatpush.msra.mxu0 0.0
        %804 = vmatpush.msra.mxu0 0.0
        %805 = vmatpush.msra.mxu0 0.0
        %806 = vmatpush.msra.mxu0 0.0
        %807 = vmatpush.msra.mxu0 0.0
        %808 = vmatpush.msra.mxu0 0.0
        %809 = vmatpush.msra.mxu0 0.0
        %810 = vmatpush.msra.mxu0 %v528
        %811 = vmatmul.f32.gmra.mxu0 %v793
        %v812 = vpop.f32.mrf.mxu0
        %v813 = vadd.f32 0.0, %v812
        %814 = vdwg.mxu0
        %v816 = vsel %vm604, %v789, 0
        %818 = vmatpush.msra.mxu0 0.0
        %819 = vmatpush.msra.mxu0 0.0
        %820 = vmatpush.msra.mxu0 0.0
        %821 = vmatpush.msra.mxu0 0.0
        %822 = vmatpush.msra.mxu0 0.0
        %823 = vmatpush.msra.mxu0 0.0
        %824 = vmatpush.msra.mxu0 0.0
        %825 = vmatpush.msra.mxu0 0.0
        %826 = vmatpush.msra.mxu0 0.0
        %827 = vmatpush.msra.mxu0 0.0
        %828 = vmatpush.msra.mxu0 0.0
        %829 = vmatpush.msra.mxu0 0.0
        %830 = vmatpush.msra.mxu0 0.0
        %831 = vmatpush.msra.mxu0 0.0
        %832 = vmatpush.msra.mxu0 0.0
        %833 = vmatpush.msra.mxu0 %v588
        %834 = vmatmul.f32.gmra.mxu0 %v816
        %v835 = vpop.f32.mrf.mxu0
        %v836 = vadd.f32 0.0, %v835
        %837 = vdwg.mxu0
        %v839 = vsel %vm604, %v790, 0
        %841 = vmatpush.msra.mxu0 0.0
        %842 = vmatpush.msra.mxu0 0.0
        %843 = vmatpush.msra.mxu0 0.0
        %844 = vmatpush.msra.mxu0 0.0
        %845 = vmatpush.msra.mxu0 0.0
        %846 = vmatpush.msra.mxu0 0.0
        %847 = vmatpush.msra.mxu0 0.0
        %848 = vmatpush.msra.mxu0 0.0
        %849 = vmatpush.msra.mxu0 0.0
        %850 = vmatpush.msra.mxu0 0.0
        %851 = vmatpush.msra.mxu0 0.0
        %852 = vmatpush.msra.mxu0 0.0
        %853 = vmatpush.msra.mxu0 0.0
        %854 = vmatpush.msra.mxu0 0.0
        %855 = vmatpush.msra.mxu0 0.0
        %856 = vmatpush.msra.mxu0 %v591
        %857 = vmatmul.f32.gmra.mxu0 %v839
        %v858 = vpop.f32.mrf.mxu0
        %v859 = vadd.f32 0.0, %v858
        %860 = vdwg.mxu0
        %v862 = vsel %vm604, %v791, 0
        %864 = vmatpush.msra.mxu0 0.0
        %865 = vmatpush.msra.mxu0 0.0
        %866 = vmatpush.msra.mxu0 0.0
        %867 = vmatpush.msra.mxu0 0.0
        %868 = vmatpush.msra.mxu0 0.0
        %869 = vmatpush.msra.mxu0 0.0
        %870 = vmatpush.msra.mxu0 0.0
        %871 = vmatpush.msra.mxu0 0.0
        %872 = vmatpush.msra.mxu0 0.0
        %873 = vmatpush.msra.mxu0 0.0
        %874 = vmatpush.msra.mxu0 0.0
        %875 = vmatpush.msra.mxu0 0.0
        %876 = vmatpush.msra.mxu0 0.0
        %877 = vmatpush.msra.mxu0 0.0
        %878 = vmatpush.msra.mxu0 0.0
        %879 = vmatpush.msra.mxu0 %v594
        %880 = vmatmul.f32.gmra.mxu0 %v862
        %v881 = vpop.f32.mrf.mxu0
        %v882 = vadd.f32 0.0, %v881
        %883 = vdwg.mxu0
        %885 = vrot.lane.b32.xlu0 %v836, 8
        %v886 = vpop.permute.xlu0 %885
        %889 = vrot.lane.b32.xlu0 %v859, 16
        %v890 = vpop.permute.xlu0 %889
        %893 = vrot.lane.b32.xlu0 %v882, 24
        %v894 = vpop.permute.xlu0 %893
        %v896 = vsel %vm604, %v813, %v886
        %vm897 = vcmask 130048
        %v898 = vsel %vm897, %v896, %v890
        %vm899 = vcmask 195584
        %v900 = vsel %vm899, %v898, %v894
        %v901 = vld [vmem:[#allocation10] sm:$0xff]
        %v902 = vld [vmem:[#allocation10 + $0x8] sm:$0xff]
        %v903 = vld [vmem:[#allocation10 + $0x10] sm:$0xff]
        %v904 = vld [vmem:[#allocation10 + $0x18] sm:$0xff]
        %v905 = vld [vmem:[%s10] sm:$0x1]
        %v907 = vperm.slane %v905, 0
        %v910 = vsel %vm479, %v900, 0
        %912 = vmatpush.msra.mxu0 0.0
        %913 = vmatpush.msra.mxu0 0.0
        %914 = vmatpush.msra.mxu0 0.0
        %915 = vmatpush.msra.mxu0 0.0
        %916 = vmatpush.msra.mxu0 0.0
        %917 = vmatpush.msra.mxu0 0.0
        %918 = vmatpush.msra.mxu0 0.0
        %919 = vmatpush.msra.mxu0 0.0
        %920 = vmatpush.msra.mxu0 0.0
        %921 = vmatpush.msra.mxu0 0.0
        %922 = vmatpush.msra.mxu0 0.0
        %923 = vmatpush.msra.mxu0 0.0
        %924 = vmatpush.msra.mxu0 %v904
        %925 = vmatpush.msra.mxu0 %v903
        %926 = vmatpush.msra.mxu0 %v902
        %927 = vmatpush.msra.mxu0 %v901
        %928 = vmatmul.f32.gmra.mxu0 %v910
        %v929 = vpop.f32.mrf.mxu0
        %v930 = vadd.f32 %v907, %v929
        %931 = vdwg.mxu0
        %932 = vst.msk [vmem:[%s469] sm:$0xff] %vm479, %v930
        %s933 = sand.u32 %s274, 1
        %s934 = scalar_lea.sflag [#allocation4], %s933
        %s935 = sand.u32 %s274, 1
        %s936 = smul.addr %s935, 8
        %s937 = scalar_lea.vmem [#allocation11], %s936
        // Predicated region
        $region85: #{tpu_custom_call.1} parent=63 // pred_check
          %p938 = pneg %p284
        $region86: #{tpu_custom_call.1} parent=63 // pred_check_branch
          %940 = sbr.rel (%p938) target = $region88
        $region87: #{tpu_custom_call.1} parent=63 // pred_region
          %942 = vsyncadd %s934, 0
          %s943 = smul.addr %s30, 8
          %s944 = scalar_lea.hbm %s11, %s943
          %s946 = sshll.u32 %s937, 4
          %s947 = int_to_ptr.vmem [resolvable:$true] %s946
          %s948 = sshll.u32 %s944, 4
          %s949 = int_to_ptr.hbm [resolvable:$true] %s948
          %951 = dma.vmem_to_hbm [thread:$0]  %s947, 128, %s949, %s934
        $region88: #{tpu_custom_call.1} parent=63 // pred_fallthru
          _
      $region64: #{tpu_custom_call.1} parent=5 // pred_fallthru
        _
      %p952 = scmp.le.s32.totalorder 2, %s25
      // Predicated region
      $region89: #{tpu_custom_call.1} parent=5 // pred_check
        %p953 = pneg %p952
      $region90: #{tpu_custom_call.1} parent=5 // pred_check_branch
        %955 = sbr.rel (%p953) target = $region92
      $region91: #{tpu_custom_call.1} parent=5 // pred_region
        %s956 = ssub.s32 %s25, 2
        // Predicated region
        $region93: #{tpu_custom_call.1} parent=91 // pred_check
          %p957 = pneg %p290
        $region94: #{tpu_custom_call.1} parent=91 // pred_check_branch
          %959 = sbr.rel (%p957) target = $region96
        $region95: #{tpu_custom_call.1} parent=91 // pred_region
          %s960 = sand.u32 %s275, 1
          %s961 = scalar_lea.sflag [#allocation4], %s960
          %s962 = sand.u32 %s275, 1
          %s963 = smul.addr %s962, 8
          %s964 = scalar_lea.vmem [#allocation11], %s963
          %966 = dma.done %s961, 128
        $region96: #{tpu_custom_call.1} parent=91 // pred_fallthru
          _
      $region92: #{tpu_custom_call.1} parent=5 // pred_fallthru
        _
    $region6: #{tpu_custom_call.1} parent=1 // loop_footer
      %s29 = sadd.s32 1, %s25
    $region7: #{tpu_custom_call.1} parent=1 // loop_footer_branch
      %24 = sbr.rel target = $region3
    $region8: #{tpu_custom_call.1} parent=1 // loop_exit
      _
    %967 = vsyncpa [#allocation3], 1
    %s968 = scalar_lea.sflag [#allocation3], 1
    %969 = vsyncpa %s968, 1
    %970 = vsyncpa [#allocation6], 1
    %971 = vsyncpa [#allocation9], 1
    %972 = vsyncpa [#allocation4], 1
    %s973 = scalar_lea.sflag [#allocation4], 1
    %974 = vsyncpa %s973, 1

</llo_original>
